<compile_context>
chip_gen: v6e
topology: v6e:2x2x1
jax: 0.10.0
libtpu: 0.0.40
codegen_flags: <defaults>
</compile_context>

<pallas_src>
import math
import functools

import jax
import jax.numpy as jnp
from jax.experimental import pallas as pl
from jax.experimental.pallas import tpu as pltpu


def _add_layernorm_kernel(x_ref, res_ref, g_ref, b_ref, o_ref, *, eps):
    # x_ref/res_ref: (tm, H) row tiles; g_ref/b_ref: (1, H) resident f32 params.
    x = x_ref[...].astype(jnp.float32) + res_ref[...].astype(jnp.float32)
    u = jnp.mean(x, axis=-1, keepdims=True)
    d = x - u
    s = jnp.mean(d * d, axis=-1, keepdims=True)
    inv = jax.lax.rsqrt(s + eps)                      # EUP slot, ~free
    y = g_ref[...] * (d * inv) + b_ref[...]
    o_ref[...] = y.astype(o_ref.dtype)


def _round_up(n, m):
    return ((n + m - 1) // m) * m


def add_layernorm(x, residual, gamma, beta, *, eps=1e-12, tm=256):
    """Fused (x + residual) -> BertLayerNorm over the last axis.

    x, residual: (..., H); gamma, beta: (H,). Returns same shape/dtype as x.
    """
    orig_shape = x.shape
    H = orig_shape[-1]
    M = 1
    for d in orig_shape[:-1]:
        M *= d

    x2d = x.reshape(M, H)
    r2d = residual.reshape(M, H)

    # Row tile: large for real workloads, clamped (to a multiple of 8) for tiny M.
    tm_eff = min(tm, _round_up(M, 8))
    grid_m = pl.cdiv(M, tm_eff)
    Mp = grid_m * tm_eff
    if Mp != M:
        pad = Mp - M
        x2d = jnp.pad(x2d, ((0, pad), (0, 0)))
        r2d = jnp.pad(r2d, ((0, pad), (0, 0)))

    # Cast affine params to f32 once (outside the grid loop), shape (1, H).
    g2d = gamma.astype(jnp.float32).reshape(1, H)
    b2d = beta.astype(jnp.float32).reshape(1, H)

    itemsize = jnp.dtype(x.dtype).itemsize
    cost = pl.CostEstimate(
        flops=8 * M * H,
        transcendentals=M,
        bytes_accessed=3 * M * H * itemsize + 2 * H * 4,
    )

    out2d = pl.pallas_call(
        functools.partial(_add_layernorm_kernel, eps=eps),
        out_shape=jax.ShapeDtypeStruct((Mp, H), x.dtype),
        grid_spec=pltpu.PrefetchScalarGridSpec(
            num_scalar_prefetch=0,
            grid=(grid_m,),
            in_specs=[
                pl.BlockSpec((tm_eff, H), lambda i: (i, 0)),  # x rows (tiled)
                pl.BlockSpec((tm_eff, H), lambda i: (i, 0)),  # residual rows
                pl.BlockSpec((1, H), lambda i: (0, 0)),       # gamma (resident)
                pl.BlockSpec((1, H), lambda i: (0, 0)),       # beta  (resident)
            ],
            out_specs=pl.BlockSpec((tm_eff, H), lambda i: (i, 0)),
        ),
        compiler_params=pltpu.CompilerParams(
            dimension_semantics=("parallel",),
            vmem_limit_bytes=64 << 20,
        ),
        cost_estimate=cost,
    )(x2d, r2d, g2d, b2d)

    if Mp != M:
        out2d = out2d[:M]
    return out2d.reshape(orig_shape)


def co_attention_layernorm(hidden_states1, input_tensor1,
                           hidden_states2, input_tensor2,
                           gamma1, beta1, gamma2, beta2, *, eps=1e-12):
    """Forward pass of CoAttentionLayerNorm (two independent add+LayerNorm)."""
    out1 = add_layernorm(hidden_states1, input_tensor1, gamma1, beta1, eps=eps)
    out2 = add_layernorm(hidden_states2, input_tensor2, gamma2, beta2, eps=eps)
    return out1, out2


def _reference_layernorm(x, gamma, beta, eps=1e-12):
    u = jnp.mean(x, axis=-1, keepdims=True)
    s = jnp.mean((x - u) ** 2, axis=-1, keepdims=True)
    return gamma * ((x - u) / jnp.sqrt(s + eps)) + beta


if __name__ == "__main__":
    batch, seq1, seq2, hidden_dim = 2, 8, 12, 32

    key = jax.random.PRNGKey(0)
    k1, k2, k3, k4, k5, k6, k7, k8 = jax.random.split(key, 8)

    h1 = jax.random.normal(k1, (batch, seq1, hidden_dim), dtype=jnp.float32)
    i1 = jax.random.normal(k2, (batch, seq1, hidden_dim), dtype=jnp.float32)
    h2 = jax.random.normal(k3, (batch, seq2, hidden_dim), dtype=jnp.float32)
    i2 = jax.random.normal(k4, (batch, seq2, hidden_dim), dtype=jnp.float32)

    # PyTorch init is gamma=1, beta=0; perturb so the affine path is exercised.
    g1 = 1.0 + 0.1 * jax.random.normal(k5, (hidden_dim,), dtype=jnp.float32)
    b1 = 0.1 * jax.random.normal(k6, (hidden_dim,), dtype=jnp.float32)
    g2 = 1.0 + 0.1 * jax.random.normal(k7, (hidden_dim,), dtype=jnp.float32)
    b2 = 0.1 * jax.random.normal(k8, (hidden_dim,), dtype=jnp.float32)

    out1, out2 = co_attention_layernorm(h1, i1, h2, i2, g1, b1, g2, b2)
    out1 = jax.block_until_ready(out1)
    out2 = jax.block_until_ready(out2)

    ref1 = _reference_layernorm(h1 + i1, g1, b1)
    ref2 = _reference_layernorm(h2 + i2, g2, b2)

    assert out1.shape == (batch, seq1, hidden_dim)
    assert out2.shape == (batch, seq2, hidden_dim)
    assert jnp.allclose(out1, ref1, atol=1e-5, rtol=1e-5), "stream-1 mismatch vs reference"
    assert jnp.allclose(out2, ref2, atol=1e-5, rtol=1e-5), "stream-2 mismatch vs reference"

    print("KERNEL_OK")
</pallas_src>

<mosaic_0001>
module attributes {stable_mosaic.version = 11 : i64} {
  func.func @_add_layernorm_kernel(%arg0: i32, %arg1: memref<16x32xf32, #tpu.memory_space<vmem>>, %arg2: memref<16x32xf32, #tpu.memory_space<vmem>>, %arg3: memref<1x32xf32, #tpu.memory_space<vmem>>, %arg4: memref<1x32xf32, #tpu.memory_space<vmem>>, %arg5: memref<16x32xf32, #tpu.memory_space<vmem>>) attributes {dimension_semantics = [#tpu.dimension_semantics<parallel>], iteration_bounds = array<i64: 1>, scalar_prefetch = 0 : i64, scratch_operands = 0 : i64, tpu.core_type = #tpu.core_type<tc>, window_params = [{transform_indices = @transform_0, window_bounds = array<i64: 16, 32>}, {transform_indices = @transform_1, window_bounds = array<i64: 16, 32>}, {pipeline_mode = #tpu.pipeline_mode<synchronous>, transform_indices = @transform_2, window_bounds = array<i64: 1, 32>}, {pipeline_mode = #tpu.pipeline_mode<synchronous>, transform_indices = @transform_3, window_bounds = array<i64: 1, 32>}, {transform_indices = @transform_4, window_bounds = array<i64: 16, 32>}]} {
    %c0 = arith.constant 0 : index
    %c0_0 = arith.constant 0 : index
    %0 = vector.load %arg1[%c0, %c0_0] : memref<16x32xf32, #tpu.memory_space<vmem>>, vector<16x32xf32>
    %c0_1 = arith.constant 0 : index
    %c0_2 = arith.constant 0 : index
    %1 = vector.load %arg2[%c0_1, %c0_2] : memref<16x32xf32, #tpu.memory_space<vmem>>, vector<16x32xf32>
    %2 = arith.addf %0, %1 : vector<16x32xf32>
    %cst = arith.constant dense<0.000000e+00> : vector<16xf32>
    %3 = vector.multi_reduction <add>, %2, %cst [1] : vector<16x32xf32> to vector<16xf32>
    %4 = vector.shape_cast %3 : vector<16xf32> to vector<16x1xf32>
    %cst_3 = arith.constant 3.200000e+01 : f32
    %5 = vector.broadcast %cst_3 : f32 to vector<16x1xf32>
    %6 = arith.divf %4, %5 : vector<16x1xf32>
    %7 = vector.broadcast %6 : vector<16x1xf32> to vector<16x32xf32>
    %8 = arith.subf %2, %7 : vector<16x32xf32>
    %9 = arith.mulf %8, %8 : vector<16x32xf32>
    %cst_4 = arith.constant dense<0.000000e+00> : vector<16xf32>
    %10 = vector.multi_reduction <add>, %9, %cst_4 [1] : vector<16x32xf32> to vector<16xf32>
    %11 = vector.shape_cast %10 : vector<16xf32> to vector<16x1xf32>
    %cst_5 = arith.constant 3.200000e+01 : f32
    %12 = vector.broadcast %cst_5 : f32 to vector<16x1xf32>
    %13 = arith.divf %11, %12 : vector<16x1xf32>
    %cst_6 = arith.constant 9.99999996E-13 : f32
    %14 = vector.broadcast %cst_6 : f32 to vector<16x1xf32>
    %15 = arith.addf %13, %14 : vector<16x1xf32>
    %16 = math.rsqrt %15 : vector<16x1xf32>
    %c0_7 = arith.constant 0 : index
    %c0_8 = arith.constant 0 : index
    %17 = vector.load %arg3[%c0_7, %c0_8] : memref<1x32xf32, #tpu.memory_space<vmem>>, vector<1x32xf32>
    %18 = vector.broadcast %16 : vector<16x1xf32> to vector<16x32xf32>
    %19 = arith.mulf %8, %18 : vector<16x32xf32>
    %20 = vector.broadcast %17 : vector<1x32xf32> to vector<16x32xf32>
    %21 = arith.mulf %20, %19 : vector<16x32xf32>
    %c0_9 = arith.constant 0 : index
    %c0_10 = arith.constant 0 : index
    %22 = vector.load %arg4[%c0_9, %c0_10] : memref<1x32xf32, #tpu.memory_space<vmem>>, vector<1x32xf32>
    %23 = vector.broadcast %22 : vector<1x32xf32> to vector<16x32xf32>
    %24 = arith.addf %21, %23 : vector<16x32xf32>
    %c0_11 = arith.constant 0 : index
    %c0_12 = arith.constant 0 : index
    %25 = vector.load %arg5[%c0_11, %c0_12] : memref<16x32xf32, #tpu.memory_space<vmem>>, vector<16x32xf32>
    tpu.vector_store %arg5[%c0_11, %c0_12], %24 {strides = array<i32>} : memref<16x32xf32, #tpu.memory_space<vmem>>, vector<16x32xf32>,
    return
  }
  func.func @transform_0(%arg0: i32) -> (i32, i32) {
    %c0_i32 = arith.constant 0 : i32
    %c0_i32_0 = arith.constant 0 : i32
    return %arg0, %c0_i32 : i32, i32
  }
  func.func @transform_1(%arg0: i32) -> (i32, i32) {
    %c0_i32 = arith.constant 0 : i32
    %c0_i32_0 = arith.constant 0 : i32
    return %arg0, %c0_i32 : i32, i32
  }
  func.func @transform_2(%arg0: i32) -> (i32, i32) {
    %c0_i32 = arith.constant 0 : i32
    %c0_i32_0 = arith.constant 0 : i32
    %c0_i32_1 = arith.constant 0 : i32
    return %c0_i32, %c0_i32_0 : i32, i32
  }
  func.func @transform_3(%arg0: i32) -> (i32, i32) {
    %c0_i32 = arith.constant 0 : i32
    %c0_i32_0 = arith.constant 0 : i32
    %c0_i32_1 = arith.constant 0 : i32
    return %c0_i32, %c0_i32_0 : i32, i32
  }
  func.func @transform_4(%arg0: i32) -> (i32, i32) {
    %c0_i32 = arith.constant 0 : i32
    %c0_i32_0 = arith.constant 0 : i32
    return %arg0, %c0_i32 : i32, i32
  }
}

</mosaic_0001>

<llo_original>
// kernel: tpu_custom_call.1
$region0: #{tpu_custom_call.1}
  #allocation0 [shape = 'u32[]', space=smem, size = 0x4, offset = 0x4, fixed_abs, tag = 'smem constant byte address 0x4 - core index']
  #allocation1 [shape = 'u32[144,128]{1,0:T(1,128)}', space=vmem, size = 0x12000, scoped, tag = 'internal scratch']
  %s0 = inlined_call_operand.hbm [shape: f32[16,32], index: 0, kind: input, shape index: {}]
  %s1 = inlined_call_operand.hbm [shape: f32[16,32], index: 1, kind: input, shape index: {}]
  %s2 = inlined_call_operand.vmem [shape: f32[1,32], index: 2, kind: input, shape index: {}]
  %s3 = inlined_call_operand.vmem [shape: f32[1,32], index: 3, kind: input, shape index: {}]
  %s4 = inlined_call_operand.hbm [shape: f32[16,32], index: 4, kind: output, shape index: {}]
  %s5 = sld [smem:[#allocation0]]
  $region34: #{tpu_custom_call.1} parent=0
    _
  %s7 = ssub.s32 1, %s5
  %s8 = scalar_select 0, %s7, %s5
  $region1: #{tpu_custom_call.1} parent=0
    #allocation2 [shape = 'u8[8192]{0}', space=vmem, size = 0x2000, scoped, tag = 'input window, operand 0, single buffered']
    #allocation3 [shape = 's32[1]{0}', space=sflag, size = 0x4, scoped, tag = 'scoped memory for tpu_custom_call.1']
    #allocation4 [shape = 's32[1]{0}', space=sflag, size = 0x4, scoped, tag = 'scoped memory for tpu_custom_call.1']
    #allocation5 [shape = 'u8[8192]{0}', space=vmem, size = 0x2000, scoped, tag = 'input window, operand 1, single buffered']
    #allocation6 [shape = 's32[1]{0}', space=sflag, size = 0x4, scoped, tag = 'scoped memory for tpu_custom_call.1']
    #allocation7 [shape = 'u8[8192]{0}', space=vmem, size = 0x2000, scoped, tag = 'output window, operand 0, single buffered']
    %9 = vsyncpa [#allocation3], 0
    %10 = vsyncpa [#allocation6], 0
    %11 = vsyncpa [#allocation4], 0
    // Predicated region
    $region2: #{tpu_custom_call.1} parent=1 // pred_check
      _
    $region3: #{tpu_custom_call.1} parent=1 // pred_check_branch
      %13 = sbr.rel (0) target = $region5
    $region4: #{tpu_custom_call.1} parent=1 // pred_region
      %s15 = ssub.s32 256, 256
      %16 = vsyncadd [#allocation3], %s15
      %s17 = sshll.u32 [#allocation2], 4
      %s18 = int_to_ptr.vmem [resolvable:$true] %s17
      %23 = dma.hbm_to_vmem [thread:$0]  %s0, 256, %s18, [#allocation3], 128, 128, 8
    $region5: #{tpu_custom_call.1} parent=1 // pred_fallthru
      _
    // Predicated region
    $region6: #{tpu_custom_call.1} parent=1 // pred_check
      _
    $region7: #{tpu_custom_call.1} parent=1 // pred_check_branch
      %25 = sbr.rel (0) target = $region9
    $region8: #{tpu_custom_call.1} parent=1 // pred_region
      %s27 = ssub.s32 256, 256
      %28 = vsyncadd [#allocation6], %s27
      %s29 = sshll.u32 [#allocation5], 4
      %s30 = int_to_ptr.vmem [resolvable:$true] %s29
      %35 = dma.hbm_to_vmem [thread:$0]  %s1, 256, %s30, [#allocation6], 128, 128, 8
    $region9: #{tpu_custom_call.1} parent=1 // pred_fallthru
      _
    // Predicated region
    $region10: #{tpu_custom_call.1} parent=1 // pred_check
      _
    $region11: #{tpu_custom_call.1} parent=1 // pred_check_branch
      %37 = sbr.rel (0) target = $region13
    $region12: #{tpu_custom_call.1} parent=1 // pred_region
      _
    $region13: #{tpu_custom_call.1} parent=1 // pred_fallthru
      _
    // Predicated region
    $region14: #{tpu_custom_call.1} parent=1 // pred_check
      _
    $region15: #{tpu_custom_call.1} parent=1 // pred_check_branch
      %39 = sbr.rel (0) target = $region17
    $region16: #{tpu_custom_call.1} parent=1 // pred_region
      _
    $region17: #{tpu_custom_call.1} parent=1 // pred_fallthru
      _
    // Predicated region
    $region18: #{tpu_custom_call.1} parent=1 // pred_check
      _
    $region19: #{tpu_custom_call.1} parent=1 // pred_check_branch
      %41 = sbr.rel (0) target = $region21
    $region20: #{tpu_custom_call.1} parent=1 // pred_region
      %42 = dma.done [#allocation3], 256
    $region21: #{tpu_custom_call.1} parent=1 // pred_fallthru
      _
    // Predicated region
    $region22: #{tpu_custom_call.1} parent=1 // pred_check
      _
    $region23: #{tpu_custom_call.1} parent=1 // pred_check_branch
      %44 = sbr.rel (0) target = $region25
    $region24: #{tpu_custom_call.1} parent=1 // pred_region
      %45 = dma.done [#allocation6], 256
    $region25: #{tpu_custom_call.1} parent=1 // pred_fallthru
      _
    %v46 = vld [vmem:[#allocation2] sm:$0xff]
    %v47 = vld [vmem:[#allocation2 + $0x8] sm:$0xff]
    %v48 = vld [vmem:[#allocation5] sm:$0xff]
    %v49 = vld [vmem:[#allocation5 + $0x8] sm:$0xff]
    %v50 = vadd.f32 %v46, %v48
    %v51 = vadd.f32 %v47, %v49
    %vm52 = vcmask 261120
    %v53 = vsel %vm52, %v50, 0.0
    %54 = vadd.xlane.f32.xlu0 %v53
    %v55 = vpop.xlane.xlu0 %54
    %v56 = vsel %vm52, %v51, 0.0
    %57 = vadd.xlane.f32.xlu0 %v56
    %v58 = vpop.xlane.xlu0 %57
    %v59 = vrcp.pop 32.0
    %v60 = vmul.f32 %v55, %v59
    %v61 = vmul.f32 %v58, %v59
    %v62 = vsub.f32 %v50, %v60
    %v63 = vsub.f32 %v51, %v61
    %v64 = vmul.f32 %v62, %v62
    %v65 = vmul.f32 %v63, %v63
    %v66 = vsel %vm52, %v64, 0.0
    %67 = vadd.xlane.f32.xlu0 %v66
    %v68 = vpop.xlane.xlu0 %67
    %v69 = vsel %vm52, %v65, 0.0
    %70 = vadd.xlane.f32.xlu0 %v69
    %v71 = vpop.xlane.xlu0 %70
    %v72 = vmul.f32 %v68, %v59
    %v73 = vmul.f32 %v71, %v59
    %v74 = vadd.f32 %v72, 1e-12
    %v75 = vadd.f32 %v73, 1e-12
    %v76 = vrsqrt.pop %v74
    %v77 = vrsqrt.pop %v75
    %v78 = vld [vmem:[%s2] sm:$0x1]
    %v79 = vmul.f32 %v62, %v76
    %v80 = vmul.f32 %v63, %v77
    %v82 = vlaneseq
    %v83 = vshrl.u32 %v82, 7
    %v84 = vsub.s32 0, %v83
    %v85 = vrot.slane %v78, %v84
    %v87 = vmul.f32 %v85, %v79
    %v88 = vmul.f32 %v85, %v80
    %v89 = vld [vmem:[%s3] sm:$0x1]
    %v91 = vlaneseq
    %v92 = vshrl.u32 %v91, 7
    %v93 = vsub.s32 0, %v92
    %v94 = vrot.slane %v89, %v93
    %v96 = vadd.f32 %v87, %v94
    %v97 = vadd.f32 %v88, %v94
    %98 = vst.msk [vmem:[#allocation7] sm:$0xff] %vm52, %v96
    %99 = vst.msk [vmem:[#allocation7 + $0x8] sm:$0xff] %vm52, %v97
    // Predicated region
    $region26: #{tpu_custom_call.1} parent=1 // pred_check
      _
    $region27: #{tpu_custom_call.1} parent=1 // pred_check_branch
      %101 = sbr.rel (0) target = $region29
    $region28: #{tpu_custom_call.1} parent=1 // pred_region
      %s103 = ssub.s32 256, 256
      %104 = vsyncadd [#allocation4], %s103
      %s105 = sshll.u32 [#allocation7], 4
      %s106 = int_to_ptr.vmem [resolvable:$true] %s105
      %111 = dma.vmem_to_hbm [thread:$0]  %s106, 256, %s4, [#allocation4], 128, 128, 8
    $region29: #{tpu_custom_call.1} parent=1 // pred_fallthru
      _
    // Predicated region
    $region30: #{tpu_custom_call.1} parent=1 // pred_check
      _
    $region31: #{tpu_custom_call.1} parent=1 // pred_check_branch
      %113 = sbr.rel (0) target = $region33
    $region32: #{tpu_custom_call.1} parent=1 // pred_region
      %114 = dma.done [#allocation4], 256
    $region33: #{tpu_custom_call.1} parent=1 // pred_fallthru
      _
    %115 = vsyncpa [#allocation3], 1
    %116 = vsyncpa [#allocation6], 1
    %117 = vsyncpa [#allocation4], 1

</llo_original>
